<compile_context>
chip_gen: v6e
topology: v6e:2x2x1
jax: 0.10.0
libtpu: 0.0.40
codegen_flags: <defaults>
</compile_context>

<pallas_src>
import functools

import jax
import jax.numpy as jnp
from jax import lax
from jax.experimental import pallas as pl
from jax.experimental.pallas import tpu as pltpu


_VMEM_TARGET = 20 * 1024 * 1024   # target working set for pipelined buffers
_VMEM_LIMIT = 32 * 1024 * 1024    # explicit scoped-VMEM cap (safe on v5e/v6e/v7x)


def _round_up(x, m):
    return ((x + m - 1) // m) * m


# ----------------------------------------------------------------------------
# Kernel 1: hoisted input projection  gi = x @ W_in + b_in  (K-tiled GEMM)
# ----------------------------------------------------------------------------
def _input_proj_kernel(x_ref, w_ref, b_ref, g_ref, acc_ref):
    k = pl.program_id(1)

    @pl.when(k == 0)
    def _():
        acc_ref[...] = jnp.zeros_like(acc_ref)

    # bf16 x bf16 -> f32 accumulate (full-rate MXU path on v6e/v7x).
    acc_ref[...] += jnp.dot(x_ref[...].astype(jnp.bfloat16), w_ref[...],
                            preferred_element_type=jnp.float32)

    @pl.when(k == pl.num_programs(1) - 1)
    def _():
        g_ref[...] = (acc_ref[...] + b_ref[...]).astype(g_ref.dtype)


def _choose_k_block(I, Hp):
    # Keep the full K resident while the (I, 6Hp) bf16 weight is small;
    # otherwise K-tile with 128-multiple blocks and an f32 accumulator.
    if I * 6 * Hp * 2 <= 8 * 1024 * 1024 or I % 128 != 0:
        return I, 1
    for kb in range(min(I, 1024), 127, -128):
        if I % kb == 0:
            return kb, I // kb
    return I, 1


def _choose_row_block(R, kb, Hp, nk):
    # Per-row bytes: x block (f32, 2 buffers) + bf16 output block (2 buffers)
    # + f32 accumulator scratch; weights single-buffered when K is untiled.
    per_row = kb * 4 * 2 + 6 * Hp * 2 * 2 + 6 * Hp * 4
    w_bytes = kb * 6 * Hp * 2 * (1 if nk == 1 else 2)
    cap = max(8, (_VMEM_TARGET - w_bytes) // per_row)
    cap = min(int(cap), 1024, R)
    cap -= cap % 8
    cap = max(cap, 8)
    for rb in range(cap, 7, -8):      # R is always a multiple of 8 (Bp padded)
        if R % rb == 0:
            return rb
    return 8


def input_projection(x2d, w_in, b_in):
    """gi = x2d @ w_in + b_in  ->  (R, 6Hp) bf16, tiled over rows (and K)."""
    R, I = x2d.shape
    N = w_in.shape[1]
    Hp = N // 6
    kb, nk = _choose_k_block(I, Hp)
    rb = _choose_row_block(R, kb, Hp, nk)
    if nk == 1:
        # Constant block index -> single buffer (halves weight VMEM footprint).
        w_spec = pl.BlockSpec((kb, N), lambda r, k: (k, 0),
                              pipeline_mode=pl.Buffered(1))
    else:
        w_spec = pl.BlockSpec((kb, N), lambda r, k: (k, 0))
    return pl.pallas_call(
        _input_proj_kernel,
        out_shape=jax.ShapeDtypeStruct((R, N), jnp.bfloat16),
        grid_spec=pltpu.PrefetchScalarGridSpec(
            num_scalar_prefetch=0,
            grid=(R // rb, nk),
            in_specs=[
                pl.BlockSpec((rb, kb), lambda r, k: (r, k)),
                w_spec,
                pl.BlockSpec((1, N), lambda r, k: (0, 0),
                             pipeline_mode=pl.Buffered(1)),
            ],
            out_specs=pl.BlockSpec((rb, N), lambda r, k: (r, 0)),
            scratch_shapes=[pltpu.VMEM((rb, N), jnp.float32)],
        ),
        compiler_params=pltpu.CompilerParams(
            dimension_semantics=("parallel", "arbitrary"),
            vmem_limit_bytes=_VMEM_LIMIT,
        ),
    )(x2d, w_in, b_in)


# ----------------------------------------------------------------------------
# Kernel 2: fused bidirectional GRU recurrence, Tb timesteps per grid step.
# ----------------------------------------------------------------------------
def _bidir_gru_rec_kernel(gi_f_ref, gi_b_ref, whh_ref, bhn_ref, h0_ref,
                          yf_ref, yb_ref, h_scr,
                          *, Hp, Tb, T_real, T_pad, unroll):
    # gi_f_ref : (Tb, Bp, 3Hp) bf16  fwd gate inputs [r|z|n] at time i*Tb + j
    # gi_b_ref : (Tb, Bp, 3Hp) bf16  bwd gate inputs; row Tb-1-j is the bwd step
    #            at time (nt-1-i)*Tb + (Tb-1-j)      (reversed block index_map)
    # whh_ref  : (2Hp, 6Hp) bf16 block-diagonal hidden weights
    # bhn_ref  : (2, Hp) f32  n-gate hidden biases (row 0 fwd, row 1 bwd)
    # h0_ref   : (Bp, 2Hp) f32 initial hidden [h_f | h_b]
    # yf_ref   : (Tb, Bp, Hp) f32  forward outputs (forward block order)
    # yb_ref   : (Tb, Bp, Hp) f32  backward outputs, written time-aligned
    # h_scr    : (Bp, 2Hp) f32  persistent hidden state across grid steps
    i = pl.program_id(0)
    nt = pl.num_programs(0)

    @pl.when(i == 0)
    def _init():
        h_scr[...] = h0_ref[...]

    whh = whh_ref[...]
    bhn_f = bhn_ref[0:1, :]
    bhn_b = bhn_ref[1:2, :]
    padded = T_pad > T_real

    def step(j, h):
        # One block-diagonal hidden matmul for both directions (K=2Hp, N=6Hp).
        gh = jnp.dot(h.astype(jnp.bfloat16), whh,
                     preferred_element_type=jnp.float32)          # (Bp, 6Hp)
        jb = Tb - 1 - j

        h_f = h[:, :Hp]
        h_b = h[:, Hp:]
        gh_f = gh[:, :3 * Hp]
        gh_b = gh[:, 3 * Hp:]
        gi_f = gi_f_ref[j].astype(jnp.float32)                    # (Bp, 3Hp)
        gi_b = gi_b_ref[jb].astype(jnp.float32)

        # Forward direction, time i*Tb + j.  One sigmoid over the contiguous
        # [r|z] slab, and h' = n + z*(h - n)  (saves one VALU op per element).
        rz_f = jax.nn.sigmoid(gi_f[:, :2 * Hp] + gh_f[:, :2 * Hp])
        n_f = jnp.tanh(gi_f[:, 2 * Hp:]
                       + rz_f[:, :Hp] * (gh_f[:, 2 * Hp:] + bhn_f))
        hf_new = n_f + rz_f[:, Hp:] * (h_f - n_f)

        # Backward direction, time (nt-1-i)*Tb + jb.
        rz_b = jax.nn.sigmoid(gi_b[:, :2 * Hp] + gh_b[:, :2 * Hp])
        n_b = jnp.tanh(gi_b[:, 2 * Hp:]
                       + rz_b[:, :Hp] * (gh_b[:, 2 * Hp:] + bhn_b))
        hb_new = n_b + rz_b[:, Hp:] * (h_b - n_b)
        if padded:
            # Skip padded (t >= T_real) backward steps so h_b is still the
            # initial state when the first real step (t = T_real-1) arrives.
            t_b = (nt - 1 - i) * Tb + jb
            hb_new = jnp.where(t_b < T_real, hb_new, h_b)

        yf_ref[j] = hf_new
        yb_ref[jb] = hb_new
        return jnp.concatenate([hf_new, hb_new], axis=1)

    h_scr[...] = lax.fori_loop(0, Tb, step, h_scr[...], unroll=unroll)


def _choose_time_block(T, Bp, Hp):
    # Per-timestep VMEM: two bf16 3Hp gi streams (double-buffered) + the two
    # f32 output blocks (double-buffered); weights/h are a fixed overhead.
    per_t = 2 * 2 * Bp * 3 * Hp * 2 + 2 * 2 * Bp * Hp * 4
    fixed = 2 * Hp * 6 * Hp * 2 + 2 * Bp * 2 * Hp * 4 + 2 * Hp * 4
    tb = max(1, (_VMEM_TARGET - fixed) // per_t)
    return int(min(tb, 16, T))


def bidir_gru_recurrence(gi, w_hh, b_hn, h0, *, Tb, T_real):
    T_pad, Bp, N6 = gi.shape
    Hp = N6 // 6
    nt = T_pad // Tb
    # Full unroll at small tiles; partial unroll bounds vreg pressure otherwise.
    unroll = Tb if Bp * Hp <= 16 * 1024 else 4
    kernel = functools.partial(_bidir_gru_rec_kernel, Hp=Hp, Tb=Tb,
                               T_real=T_real, T_pad=T_pad, unroll=unroll)
    return pl.pallas_call(
        kernel,
        out_shape=(jax.ShapeDtypeStruct((T_pad, Bp, Hp), jnp.float32),
                   jax.ShapeDtypeStruct((T_pad, Bp, Hp), jnp.float32)),
        grid_spec=pltpu.PrefetchScalarGridSpec(
            num_scalar_prefetch=0,
            grid=(nt,),
            in_specs=[
                # Same gi array twice: fwd 3Hp half, forward block order ...
                pl.BlockSpec((Tb, Bp, 3 * Hp), lambda i: (i, 0, 0)),
                # ... bwd 3Hp half, reversed time-block order (no JAX-side
                # interleave / reverse passes over gi).
                pl.BlockSpec((Tb, Bp, 3 * Hp), lambda i: (nt - 1 - i, 0, 1)),
                pl.BlockSpec((2 * Hp, 6 * Hp), lambda i: (0, 0),
                             pipeline_mode=pl.Buffered(1)),
                pl.BlockSpec((2, Hp), lambda i: (0, 0),
                             pipeline_mode=pl.Buffered(1)),
                pl.BlockSpec((Bp, 2 * Hp), lambda i: (0, 0),
                             pipeline_mode=pl.Buffered(1)),
            ],
            out_specs=(
                pl.BlockSpec((Tb, Bp, Hp), lambda i: (i, 0, 0)),
                # Backward outputs land already time-aligned.
                pl.BlockSpec((Tb, Bp, Hp), lambda i: (nt - 1 - i, 0, 0)),
            ),
            scratch_shapes=[pltpu.VMEM((Bp, 2 * Hp), jnp.float32)],
        ),
        compiler_params=pltpu.CompilerParams(
            dimension_semantics=("arbitrary",),   # sequential recurrence
            vmem_limit_bytes=_VMEM_LIMIT,
        ),
    )(gi, gi, w_hh, b_hn, h0)


# ----------------------------------------------------------------------------
# EncoderRNN module (parameter packing + layer stacking in plain JAX).
# ----------------------------------------------------------------------------
class EncoderRNNPallas:
    def __init__(self, input_size, hidden_size, n_layers=1, key=None):
        self.input_size = input_size
        self.hidden_size = hidden_size
        self.n_layers = n_layers
        # Hidden width padded to a lane-tile multiple so every per-gate,
        # per-direction slice is a whole-vreg view and every store is unmasked.
        self.Hp = _round_up(hidden_size, 128)
        if key is None:
            key = jax.random.PRNGKey(0)
        H = hidden_size
        k = 1.0 / float(H) ** 0.5
        self.raw_params = []      # PyTorch-layout params (used by the reference)
        self.packed_params = []   # kernel-ready packed (padded, bf16) params
        for layer in range(n_layers):
            layer_in = input_size if layer == 0 else 2 * hidden_size
            dirs = []
            for _ in range(2):    # forward, backward
                key, k1, k2, k3, k4 = jax.random.split(key, 5)
                dirs.append({
                    "w_ih": jax.random.uniform(k1, (3 * H, layer_in), jnp.float32, -k, k),
                    "w_hh": jax.random.uniform(k2, (3 * H, H), jnp.float32, -k, k),
                    "b_ih": jax.random.uniform(k3, (3 * H,), jnp.float32, -k, k),
                    "b_hh": jax.random.uniform(k4, (3 * H,), jnp.float32, -k, k),
                })
            self.raw_params.append(tuple(dirs))
            self.packed_params.append(self._pack_layer(dirs[0], dirs[1], layer))

    def _pack_layer(self, pf, pb, layer_idx):
        """Pack one layer's params, padded to (Hp) lanes, weights in bf16.

        Column order of w_in / w_hh (6 blocks of width Hp):
            [r_f, z_f, n_f, r_b, z_b, n_b]
        so the fwd gi stream is cols [0:3Hp] and the bwd stream cols [3Hp:6Hp].
        Padded rows/cols are zero, so padded hidden units stay exactly zero.
        """
        H, Hp = self.hidden_size, self.Hp
        first = layer_idx == 0
        in_real = pf["w_ih"].shape[1]
        Ip = in_real if first else 2 * Hp
        w_in = jnp.zeros((Ip, 6 * Hp), jnp.float32)
        b_in = jnp.zeros((1, 6 * Hp), jnp.float32)
        w_hh = jnp.zeros((2 * Hp, 6 * Hp), jnp.float32)
        b_hn = jnp.zeros((2, Hp), jnp.float32)
        for d, p in enumerate((pf, pb)):
            wiT = p["w_ih"].T                      # (I_in, 3H), gate cols [r|z|n]
            whT = p["w_hh"].T                      # (H, 3H)
            bi, bh = p["b_ih"], p["b_hh"]
            for g in range(3):                     # 0:r 1:z 2:n
                c0 = (3 * d + g) * Hp
                wi_g = wiT[:, g * H:(g + 1) * H]
                if first:
                    w_in = w_in.at[:, c0:c0 + H].set(wi_g)
                else:
                    # layer>0 input layout: [fwd real | fwd pad | bwd real | bwd pad]
                    w_in = w_in.at[0:H, c0:c0 + H].set(wi_g[0:H])
                    w_in = w_in.at[Hp:Hp + H, c0:c0 + H].set(wi_g[H:2 * H])
                w_hh = w_hh.at[d * Hp:d * Hp + H, c0:c0 + H].set(
                    whT[:, g * H:(g + 1) * H])
                if g < 2:
                    # Pre-fold b_ih + b_hh for r/z gates.
                    b_in = b_in.at[0, c0:c0 + H].set(
                        bi[g * H:(g + 1) * H] + bh[g * H:(g + 1) * H])
                else:
                    # n gate keeps b_in only (b_hn stays inside r * (...)).
                    b_in = b_in.at[0, c0:c0 + H].set(bi[2 * H:3 * H])
            b_hn = b_hn.at[d, 0:H].set(bh[2 * H:3 * H])
        return {"w_in": w_in.astype(jnp.bfloat16), "b_in": b_in,
                "w_hh": w_hh.astype(jnp.bfloat16), "b_hn": b_hn}

    def __call__(self, x, hidden=None):
        T, B, in_size = x.shape
        assert in_size == self.input_size
        H, Hp = self.hidden_size, self.Hp
        if hidden is not None:
            assert hidden.shape == (2 * self.n_layers, B, H)
        Bp = _round_up(B, 8)
        Tb = _choose_time_block(T, Bp, Hp)
        T_pad = _round_up(T, Tb)

        x_p = jnp.pad(x, ((0, T_pad - T), (0, Bp - B), (0, 0)))
        layer_input = x_p
        h_finals = []
        y_f = y_b = None
        for layer in range(self.n_layers):
            p = self.packed_params[layer]
            I = layer_input.shape[-1]

            # (1) Hoisted input GEMM for all timesteps and both directions.
            gi = input_projection(layer_input.reshape(T_pad * Bp, I),
                                  p["w_in"], p["b_in"]).reshape(T_pad, Bp, 6 * Hp)

            # (2) Initial hidden (zero by default, matching nn.GRU(hidden=None)).
            h0 = jnp.zeros((Bp, 2 * Hp), jnp.float32)
            if hidden is not None:
                h0 = h0.at[:B, :H].set(hidden[2 * layer])
                h0 = h0.at[:B, Hp:Hp + H].set(hidden[2 * layer + 1])

            # (3) Fused bidirectional sequential recurrence.
            y_f, y_b = bidir_gru_recurrence(gi, p["w_hh"], p["b_hn"], h0,
                                            Tb=Tb, T_real=T)

            h_finals.append(y_f[T - 1, :B, :H])    # fwd state after t = T-1
            h_finals.append(y_b[0, :B, :H])        # bwd state after t = 0
            if layer + 1 < self.n_layers:
                # Both halves already time-aligned -> plain concat, no reverse.
                layer_input = jnp.concatenate([y_f, y_b], axis=-1)

        # Module output: fwd output + bwd output (already time-aligned).
        outputs = (y_f + y_b)[:T, :B, :H]
        hidden_out = jnp.stack(h_finals, axis=0)   # (2 * n_layers, B, H)
        return outputs, hidden_out


# ----------------------------------------------------------------------------
# Pure-JAX reference (correctness check only), PyTorch-layout params, f32.
# ----------------------------------------------------------------------------
def _ref_gru_cell(x, h, p):
    H = h.shape[1]
    hp = jax.lax.Precision.HIGHEST
    gi = jnp.dot(x, p["w_ih"].T, precision=hp) + p["b_ih"]
    gh = jnp.dot(h, p["w_hh"].T, precision=hp) + p["b_hh"]
    r = jax.nn.sigmoid(gi[:, :H] + gh[:, :H])
    z = jax.nn.sigmoid(gi[:, H:2 * H] + gh[:, H:2 * H])
    n = jnp.tanh(gi[:, 2 * H:] + r * gh[:, 2 * H:])
    return (1.0 - z) * n + z * h


def _ref_encoder(model, x, hidden=None):
    T, B, _ = x.shape
    H = model.hidden_size
    layer_input = x
    h_finals = []
    outs_f = outs_b = None
    for layer in range(model.n_layers):
        pf, pb = model.raw_params[layer]
        if hidden is None:
            h_f = jnp.zeros((B, H), jnp.float32)
            h_b = jnp.zeros((B, H), jnp.float32)
        else:
            h_f = hidden[2 * layer]
            h_b = hidden[2 * layer + 1]
        outs_f = []
        outs_b = [None] * T
        for t in range(T):
            h_f = _ref_gru_cell(layer_input[t], h_f, pf)
            outs_f.append(h_f)
        for t in range(T - 1, -1, -1):
            h_b = _ref_gru_cell(layer_input[t], h_b, pb)
            outs_b[t] = h_b
        outs_f = jnp.stack(outs_f, axis=0)
        outs_b = jnp.stack(outs_b, axis=0)
        h_finals.extend([h_f, h_b])
        layer_input = jnp.concatenate([outs_f, outs_b], axis=-1)
    return outs_f + outs_b, jnp.stack(h_finals, axis=0)


def _check(name, got, want, tol):
    err = float(jnp.max(jnp.abs(got - want)))
    assert err <= tol, f"{name}: max abs err {err} > {tol}"


if __name__ == "__main__":
    # --- Test 1: module-default config (n_layers=1), zero initial hidden. ---
    T, B, INPUT, HIDDEN = 8, 4, 16, 32
    key = jax.random.PRNGKey(0)
    k_param, k_x, k_h, k_param2, k_x2 = jax.random.split(key, 5)

    model = EncoderRNNPallas(INPUT, HIDDEN, n_layers=1, key=k_param)
    x = jax.random.normal(k_x, (T, B, INPUT), dtype=jnp.float32)

    outputs, hidden = model(x)
    outputs = jax.block_until_ready(outputs)
    hidden = jax.block_until_ready(hidden)
    assert outputs.shape == (T, B, HIDDEN)
    assert hidden.shape == (2, B, HIDDEN)

    ref_out, ref_hid = _ref_encoder(model, x)
    # bf16 weight / gi storage -> deliberately loosened tolerance vs f32 ref.
    _check("outputs", outputs, ref_out, 3e-2)
    _check("hidden", hidden, ref_hid, 3e-2)

    # --- Test 2: user-supplied initial hidden (nn.GRU accepts one). ---
    h0 = 0.5 * jax.random.normal(k_h, (2, B, HIDDEN), dtype=jnp.float32)
    out2, hid2 = model(x, h0)
    ref_out2, ref_hid2 = _ref_encoder(model, x, h0)
    _check("outputs(h0)", out2, ref_out2, 3e-2)
    _check("hidden(h0)", hid2, ref_hid2, 3e-2)

    # --- Test 3: awkward T (prime -> time padding + masked bwd steps) and
    #             2 stacked layers (exercises the inter-layer path). ---
    T3, B3 = 19, 4
    model3 = EncoderRNNPallas(INPUT, HIDDEN, n_layers=2, key=k_param2)
    x3 = jax.random.normal(k_x2, (T3, B3, INPUT), dtype=jnp.float32)
    out3, hid3 = model3(x3)
    out3 = jax.block_until_ready(out3)
    assert out3.shape == (T3, B3, HIDDEN)
    assert hid3.shape == (4, B3, HIDDEN)
    ref_out3, ref_hid3 = _ref_encoder(model3, x3)
    _check("outputs(L2)", out3, ref_out3, 5e-2)
    _check("hidden(L2)", hid3, ref_hid3, 5e-2)

    print("KERNEL_OK")
</pallas_src>

<mosaic_0001>
module attributes {stable_mosaic.version = 11 : i64} {
  func.func @_input_proj_kernel(%arg0: i32, %arg1: i32, %arg2: memref<64x16xf32, #tpu.memory_space<vmem>>, %arg3: memref<16x768xbf16, #tpu.memory_space<vmem>>, %arg4: memref<1x768xf32, #tpu.memory_space<vmem>>, %arg5: memref<64x768xbf16, #tpu.memory_space<vmem>>, %arg6: memref<64x768xf32, #tpu.memory_space<vmem>>) attributes {dimension_semantics = [#tpu.dimension_semantics<parallel>, #tpu.dimension_semantics<arbitrary>], iteration_bounds = array<i64: 1, 1>, scalar_prefetch = 0 : i64, scratch_operands = 1 : i64, tpu.core_type = #tpu.core_type<tc>, window_params = [{transform_indices = @transform_0, window_bounds = array<i64: 64, 16>}, {pipeline_mode = #tpu.pipeline_mode<synchronous>, transform_indices = @transform_1, window_bounds = array<i64: 16, 768>}, {pipeline_mode = #tpu.pipeline_mode<synchronous>, transform_indices = @transform_2, window_bounds = array<i64: 1, 768>}, {transform_indices = @transform_3, window_bounds = array<i64: 64, 768>}]} {
    %c0_i32 = arith.constant 0 : i32
    %0 = arith.cmpi eq, %arg1, %c0_i32 : i32
    %1 = arith.extui %0 : i1 to i32
    %c0_i32_0 = arith.constant 0 : i32
    %2 = arith.cmpi ne, %1, %c0_i32_0 : i32
    scf.if %2 {
      %cst_10 = arith.constant 0.000000e+00 : f32
      %13 = vector.broadcast %cst_10 : f32 to vector<64x768xf32>
      %c0_11 = arith.constant 0 : index
      %c0_12 = arith.constant 0 : index
      %14 = vector.load %arg6[%c0_11, %c0_12] : memref<64x768xf32, #tpu.memory_space<vmem>>, vector<64x768xf32>
      tpu.vector_store %arg6[%c0_11, %c0_12], %13 {strides = array<i32>} : memref<64x768xf32, #tpu.memory_space<vmem>>, vector<64x768xf32>,
    } else {
    }
    %c0 = arith.constant 0 : index
    %c0_1 = arith.constant 0 : index
    %3 = vector.load %arg6[%c0, %c0_1] : memref<64x768xf32, #tpu.memory_space<vmem>>, vector<64x768xf32>
    %c0_2 = arith.constant 0 : index
    %c0_3 = arith.constant 0 : index
    %4 = vector.load %arg2[%c0_2, %c0_3] : memref<64x16xf32, #tpu.memory_space<vmem>>, vector<64x16xf32>
    %5 = arith.truncf %4 : vector<64x16xf32> to vector<64x16xbf16>
    %c0_4 = arith.constant 0 : index
    %c0_5 = arith.constant 0 : index
    %6 = vector.load %arg3[%c0_4, %c0_5] : memref<16x768xbf16, #tpu.memory_space<vmem>>, vector<16x768xbf16>
    %cst = arith.constant dense<0.000000e+00> : vector<64x768xf32>
    %7 = tpu.matmul %5, %6, %cst {dimension_numbers = #tpu.dot_dimension_numbers<[1], [0], [0], [1], [0, 0, 1, 1], [], []>} : vector<64x16xbf16>, vector<16x768xbf16>, vector<64x768xf32> -> vector<64x768xf32>
    %8 = arith.addf %3, %7 : vector<64x768xf32>
    %c0_6 = arith.constant 0 : index
    %c0_7 = arith.constant 0 : index
    %9 = vector.load %arg6[%c0_6, %c0_7] : memref<64x768xf32, #tpu.memory_space<vmem>>, vector<64x768xf32>
    tpu.vector_store %arg6[%c0_6, %c0_7], %8 {strides = array<i32>} : memref<64x768xf32, #tpu.memory_space<vmem>>, vector<64x768xf32>,
    %c0_i32_8 = arith.constant 0 : i32
    %10 = arith.cmpi eq, %arg1, %c0_i32_8 : i32
    %11 = arith.extui %10 : i1 to i32
    %c0_i32_9 = arith.constant 0 : i32
    %12 = arith.cmpi ne, %11, %c0_i32_9 : i32
    scf.if %12 {
      %c0_10 = arith.constant 0 : index
      %c0_11 = arith.constant 0 : index
      %13 = vector.load %arg6[%c0_10, %c0_11] : memref<64x768xf32, #tpu.memory_space<vmem>>, vector<64x768xf32>
      %c0_12 = arith.constant 0 : index
      %c0_13 = arith.constant 0 : index
      %14 = vector.load %arg4[%c0_12, %c0_13] : memref<1x768xf32, #tpu.memory_space<vmem>>, vector<1x768xf32>
      %15 = vector.broadcast %14 : vector<1x768xf32> to vector<64x768xf32>
      %16 = arith.addf %13, %15 : vector<64x768xf32>
      %17 = arith.truncf %16 : vector<64x768xf32> to vector<64x768xbf16>
      %c0_14 = arith.constant 0 : index
      %c0_15 = arith.constant 0 : index
      %18 = vector.load %arg5[%c0_14, %c0_15] : memref<64x768xbf16, #tpu.memory_space<vmem>>, vector<64x768xbf16>
      tpu.vector_store %arg5[%c0_14, %c0_15], %17 {strides = array<i32>} : memref<64x768xbf16, #tpu.memory_space<vmem>>, vector<64x768xbf16>,
    } else {
    }
    return
  }
  func.func @transform_0(%arg0: i32, %arg1: i32) -> (i32, i32) {
    %c0_i32 = arith.constant 0 : i32
    return %arg0, %arg1 : i32, i32
  }
  func.func @transform_1(%arg0: i32, %arg1: i32) -> (i32, i32) {
    %c0_i32 = arith.constant 0 : i32
    %c0_i32_0 = arith.constant 0 : i32
    return %arg1, %c0_i32 : i32, i32
  }
  func.func @transform_2(%arg0: i32, %arg1: i32) -> (i32, i32) {
    %c0_i32 = arith.constant 0 : i32
    %c0_i32_0 = arith.constant 0 : i32
    %c0_i32_1 = arith.constant 0 : i32
    return %c0_i32, %c0_i32_0 : i32, i32
  }
  func.func @transform_3(%arg0: i32, %arg1: i32) -> (i32, i32) {
    %c0_i32 = arith.constant 0 : i32
    %c0_i32_0 = arith.constant 0 : i32
    return %arg0, %c0_i32 : i32, i32
  }
}

</mosaic_0001>

<llo_original>
// kernel: tpu_custom_call.1
$region0: #{tpu_custom_call.1}
  #allocation0 [shape = 'u32[]', space=smem, size = 0x4, offset = 0x4, fixed_abs, tag = 'smem constant byte address 0x4 - core index']
  #allocation1 [shape = 'u32[144,128]{1,0:T(1,128)}', space=vmem, size = 0x12000, scoped, tag = 'internal scratch']
  #allocation2 [shape = 'f32[64,768]{1,0:T(8,128)}', space=vmem, size = 0x30000, scoped, tag = 'scratch operand']
  %s0 = inlined_call_operand.vmem [shape: f32[64,16], index: 0, kind: input, shape index: {}]
  %s1 = inlined_call_operand.vmem [shape: bf16[16,768], index: 1, kind: input, shape index: {}]
  %s2 = inlined_call_operand.vmem [shape: f32[1,768], index: 2, kind: input, shape index: {}]
  %s3 = inlined_call_operand.hbm [shape: bf16[64,768], index: 3, kind: output, shape index: {}]
  %s4 = sld [smem:[#allocation0]]
  $region30: #{tpu_custom_call.1} parent=0
    _
  %s6 = ssub.s32 1, %s4
  %s7 = scalar_select 0, %s6, %s4
  $region1: #{tpu_custom_call.1} parent=0
    #allocation3 [shape = 'u8[98304]{0}', space=vmem, size = 0x18000, scoped, tag = 'output window, operand 0, single buffered']
    #allocation4 [shape = 's32[1]{0}', space=sflag, size = 0x4, scoped, tag = 'scoped memory for tpu_custom_call.1']
    %8 = vsyncpa [#allocation4], 0
    // Predicated region
    $region2: #{tpu_custom_call.1} parent=1 // pred_check
      _
    $region3: #{tpu_custom_call.1} parent=1 // pred_check_branch
      %10 = sbr.rel (0) target = $region5
    $region4: #{tpu_custom_call.1} parent=1 // pred_region
      _
    $region5: #{tpu_custom_call.1} parent=1 // pred_fallthru
      _
    // Predicated region
    $region6: #{tpu_custom_call.1} parent=1 // pred_check
      _
    $region7: #{tpu_custom_call.1} parent=1 // pred_check_branch
      %12 = sbr.rel (0) target = $region9
    $region8: #{tpu_custom_call.1} parent=1 // pred_region
      _
    $region9: #{tpu_custom_call.1} parent=1 // pred_fallthru
      _
    // Predicated region
    $region10: #{tpu_custom_call.1} parent=1 // pred_check
      _
    $region11: #{tpu_custom_call.1} parent=1 // pred_check_branch
      %14 = sbr.rel (0) target = $region13
    $region12: #{tpu_custom_call.1} parent=1 // pred_region
      _
    $region13: #{tpu_custom_call.1} parent=1 // pred_fallthru
      _
    %p16 = scmp.eq.s32.totalorder 0, 0
    // Predicated region
    $region14: #{tpu_custom_call.1} parent=1 // pred_check
      %p17 = pneg %p16
    $region15: #{tpu_custom_call.1} parent=1 // pred_check_branch
      %19 = sbr.rel (%p17) target = $region17
    $region16: #{tpu_custom_call.1} parent=1 // pred_region
      %20 = vst [vmem:[#allocation2] sm:$0xff] 0.0
      %21 = vst [vmem:[#allocation2 + $0x8] sm:$0xff] 0.0
      %22 = vst [vmem:[#allocation2 + $0x10] sm:$0xff] 0.0
      %23 = vst [vmem:[#allocation2 + $0x18] sm:$0xff] 0.0
      %24 = vst [vmem:[#allocation2 + $0x20] sm:$0xff] 0.0
      %25 = vst [vmem:[#allocation2 + $0x28] sm:$0xff] 0.0
      %26 = vst [vmem:[#allocation2 + $0x30] sm:$0xff] 0.0
      %27 = vst [vmem:[#allocation2 + $0x38] sm:$0xff] 0.0
      %28 = vst [vmem:[#allocation2 + $0x40] sm:$0xff] 0.0
      %29 = vst [vmem:[#allocation2 + $0x48] sm:$0xff] 0.0
      %30 = vst [vmem:[#allocation2 + $0x50] sm:$0xff] 0.0
      %31 = vst [vmem:[#allocation2 + $0x58] sm:$0xff] 0.0
      %32 = vst [vmem:[#allocation2 + $0x60] sm:$0xff] 0.0
      %33 = vst [vmem:[#allocation2 + $0x68] sm:$0xff] 0.0
      %34 = vst [vmem:[#allocation2 + $0x70] sm:$0xff] 0.0
      %35 = vst [vmem:[#allocation2 + $0x78] sm:$0xff] 0.0
      %36 = vst [vmem:[#allocation2 + $0x80] sm:$0xff] 0.0
      %37 = vst [vmem:[#allocation2 + $0x88] sm:$0xff] 0.0
      %38 = vst [vmem:[#allocation2 + $0x90] sm:$0xff] 0.0
      %39 = vst [vmem:[#allocation2 + $0x98] sm:$0xff] 0.0
      %40 = vst [vmem:[#allocation2 + $0xa0] sm:$0xff] 0.0
      %41 = vst [vmem:[#allocation2 + $0xa8] sm:$0xff] 0.0
      %42 = vst [vmem:[#allocation2 + $0xb0] sm:$0xff] 0.0
      %43 = vst [vmem:[#allocation2 + $0xb8] sm:$0xff] 0.0
      %44 = vst [vmem:[#allocation2 + $0xc0] sm:$0xff] 0.0
      %45 = vst [vmem:[#allocation2 + $0xc8] sm:$0xff] 0.0
      %46 = vst [vmem:[#allocation2 + $0xd0] sm:$0xff] 0.0
      %47 = vst [vmem:[#allocation2 + $0xd8] sm:$0xff] 0.0
      %48 = vst [vmem:[#allocation2 + $0xe0] sm:$0xff] 0.0
      %49 = vst [vmem:[#allocation2 + $0xe8] sm:$0xff] 0.0
      %50 = vst [vmem:[#allocation2 + $0xf0] sm:$0xff] 0.0
      %51 = vst [vmem:[#allocation2 + $0xf8] sm:$0xff] 0.0
      %52 = vst [vmem:[#allocation2 + $0x100] sm:$0xff] 0.0
      %53 = vst [vmem:[#allocation2 + $0x108] sm:$0xff] 0.0
      %54 = vst [vmem:[#allocation2 + $0x110] sm:$0xff] 0.0
      %55 = vst [vmem:[#allocation2 + $0x118] sm:$0xff] 0.0
      %56 = vst [vmem:[#allocation2 + $0x120] sm:$0xff] 0.0
      %57 = vst [vmem:[#allocation2 + $0x128] sm:$0xff] 0.0
      %58 = vst [vmem:[#allocation2 + $0x130] sm:$0xff] 0.0
      %59 = vst [vmem:[#allocation2 + $0x138] sm:$0xff] 0.0
      %60 = vst [vmem:[#allocation2 + $0x140] sm:$0xff] 0.0
      %61 = vst [vmem:[#allocation2 + $0x148] sm:$0xff] 0.0
      %62 = vst [vmem:[#allocation2 + $0x150] sm:$0xff] 0.0
      %63 = vst [vmem:[#allocation2 + $0x158] sm:$0xff] 0.0
      %64 = vst [vmem:[#allocation2 + $0x160] sm:$0xff] 0.0
      %65 = vst [vmem:[#allocation2 + $0x168] sm:$0xff] 0.0
      %66 = vst [vmem:[#allocation2 + $0x170] sm:$0xff] 0.0
      %67 = vst [vmem:[#allocation2 + $0x178] sm:$0xff] 0.0
    $region17: #{tpu_custom_call.1} parent=1 // pred_fallthru
      _
    %v68 = vld [vmem:[#allocation2] sm:$0xff]
    %v69 = vld [vmem:[#allocation2 + $0x8] sm:$0xff]
    %v70 = vld [vmem:[#allocation2 + $0x10] sm:$0xff]
    %v71 = vld [vmem:[#allocation2 + $0x18] sm:$0xff]
    %v72 = vld [vmem:[#allocation2 + $0x20] sm:$0xff]
    %v73 = vld [vmem:[#allocation2 + $0x28] sm:$0xff]
    %v74 = vld [vmem:[#allocation2 + $0x30] sm:$0xff]
    %v75 = vld [vmem:[#allocation2 + $0x38] sm:$0xff]
    %v76 = vld [vmem:[#allocation2 + $0x40] sm:$0xff]
    %v77 = vld [vmem:[#allocation2 + $0x48] sm:$0xff]
    %v78 = vld [vmem:[#allocation2 + $0x50] sm:$0xff]
    %v79 = vld [vmem:[#allocation2 + $0x58] sm:$0xff]
    %v80 = vld [vmem:[#allocation2 + $0x60] sm:$0xff]
    %v81 = vld [vmem:[#allocation2 + $0x68] sm:$0xff]
    %v82 = vld [vmem:[#allocation2 + $0x70] sm:$0xff]
    %v83 = vld [vmem:[#allocation2 + $0x78] sm:$0xff]
    %v84 = vld [vmem:[#allocation2 + $0x80] sm:$0xff]
    %v85 = vld [vmem:[#allocation2 + $0x88] sm:$0xff]
    %v86 = vld [vmem:[#allocation2 + $0x90] sm:$0xff]
    %v87 = vld [vmem:[#allocation2 + $0x98] sm:$0xff]
    %v88 = vld [vmem:[#allocation2 + $0xa0] sm:$0xff]
    %v89 = vld [vmem:[#allocation2 + $0xa8] sm:$0xff]
    %v90 = vld [vmem:[#allocation2 + $0xb0] sm:$0xff]
    %v91 = vld [vmem:[#allocation2 + $0xb8] sm:$0xff]
    %v92 = vld [vmem:[#allocation2 + $0xc0] sm:$0xff]
    %v93 = vld [vmem:[#allocation2 + $0xc8] sm:$0xff]
    %v94 = vld [vmem:[#allocation2 + $0xd0] sm:$0xff]
    %v95 = vld [vmem:[#allocation2 + $0xd8] sm:$0xff]
    %v96 = vld [vmem:[#allocation2 + $0xe0] sm:$0xff]
    %v97 = vld [vmem:[#allocation2 + $0xe8] sm:$0xff]
    %v98 = vld [vmem:[#allocation2 + $0xf0] sm:$0xff]
    %v99 = vld [vmem:[#allocation2 + $0xf8] sm:$0xff]
    %v100 = vld [vmem:[#allocation2 + $0x100] sm:$0xff]
    %v101 = vld [vmem:[#allocation2 + $0x108] sm:$0xff]
    %v102 = vld [vmem:[#allocation2 + $0x110] sm:$0xff]
    %v103 = vld [vmem:[#allocation2 + $0x118] sm:$0xff]
    %v104 = vld [vmem:[#allocation2 + $0x120] sm:$0xff]
    %v105 = vld [vmem:[#allocation2 + $0x128] sm:$0xff]
    %v106 = vld [vmem:[#allocation2 + $0x130] sm:$0xff]
    %v107 = vld [vmem:[#allocation2 + $0x138] sm:$0xff]
    %v108 = vld [vmem:[#allocation2 + $0x140] sm:$0xff]
    %v109 = vld [vmem:[#allocation2 + $0x148] sm:$0xff]
    %v110 = vld [vmem:[#allocation2 + $0x150] sm:$0xff]
    %v111 = vld [vmem:[#allocation2 + $0x158] sm:$0xff]
    %v112 = vld [vmem:[#allocation2 + $0x160] sm:$0xff]
    %v113 = vld [vmem:[#allocation2 + $0x168] sm:$0xff]
    %v114 = vld [vmem:[#allocation2 + $0x170] sm:$0xff]
    %v115 = vld [vmem:[#allocation2 + $0x178] sm:$0xff]
    %v116 = vld [vmem:[%s0] sm:$0xff]
    %v117 = vld [vmem:[%s0 + $0x8] sm:$0xff]
    %v118 = vld [vmem:[%s0 + $0x10] sm:$0xff]
    %v119 = vld [vmem:[%s0 + $0x18] sm:$0xff]
    %v120 = vld [vmem:[%s0 + $0x20] sm:$0xff]
    %v121 = vld [vmem:[%s0 + $0x28] sm:$0xff]
    %v122 = vld [vmem:[%s0 + $0x30] sm:$0xff]
    %v123 = vld [vmem:[%s0 + $0x38] sm:$0xff]
    %v124 = vpack.c.bf16 %v117, %v116
    %v125 = vpack.c.bf16 %v119, %v118
    %v126 = vpack.c.bf16 %v121, %v120
    %v127 = vpack.c.bf16 %v123, %v122
    %v128 = vld [vmem:[%s1] sm:$0xff]
    %v129 = vld [vmem:[%s1 + $0x8] sm:$0xff]
    %v130 = vld [vmem:[%s1 + $0x10] sm:$0xff]
    %v131 = vld [vmem:[%s1 + $0x18] sm:$0xff]
    %v132 = vld [vmem:[%s1 + $0x20] sm:$0xff]
    %v133 = vld [vmem:[%s1 + $0x28] sm:$0xff]
    %v140 = vunpack.c.l.b16 %v128
    %v141 = vunpack.c.h.b16 %v128
    %v142 = vunpack.c.l.b16 %v129
    %v143 = vunpack.c.h.b16 %v129
    %v144 = vunpack.c.l.b16 %v130
    %v145 = vunpack.c.h.b16 %v130
    %v146 = vunpack.c.l.b16 %v131
    %v147 = vunpack.c.h.b16 %v131
    %v148 = vunpack.c.l.b16 %v132
    %v149 = vunpack.c.h.b16 %v132
    %v150 = vunpack.c.l.b16 %v133
    %v151 = vunpack.c.h.b16 %v133
    %v152 = vpack.c.b16 %v146, %v140
    %v153 = vpack.c.b16 %v147, %v141
    %v154 = vpack.c.b16 %v148, %v142
    %v155 = vpack.c.b16 %v149, %v143
    %v156 = vpack.c.b16 %v150, %v144
    %v157 = vpack.c.b16 %v151, %v145
    %vm164 = vcmask 130048
    %v166 = vsel %vm164, %v124, 0
    %v169 = vsel %vm164, %v125, 0
    %v172 = vsel %vm164, %v126, 0
    %v175 = vsel %vm164, %v127, 0
    %177 = vmatprep.subr.bf16.mxu0 0
    %178 = vmatpush1.bf16.msra.mxu0 0
    %179 = vmatprep.subr.bf16.mxu0 0
    %180 = vmatpush1.bf16.msra.mxu0 0
    %181 = vmatprep.subr.bf16.mxu0 0
    %182 = vmatpush1.bf16.msra.mxu0 0
    %183 = vmatprep.subr.bf16.mxu0 0
    %184 = vmatpush1.bf16.msra.mxu0 0
    %185 = vmatprep.subr.bf16.mxu0 0
    %186 = vmatpush1.bf16.msra.mxu0 0
    %187 = vmatprep.subr.bf16.mxu0 0
    %188 = vmatpush1.bf16.msra.mxu0 0
    %189 = vmatprep.subr.bf16.mxu0 0
    %190 = vmatpush1.bf16.msra.mxu0 0
    %191 = vmatprep.subr.bf16.mxu0 %v153
    %192 = vmatpush1.bf16.msra.mxu0 %v152
    %193 = vmatprep.subr.bf16.mxu0 0
    %194 = vmatpush2.bf16.msra.mxu0 0
    %195 = vmatprep.subr.bf16.mxu0 0
    %196 = vmatpush2.bf16.msra.mxu0 0
    %197 = vmatprep.subr.bf16.mxu0 0
    %198 = vmatpush2.bf16.msra.mxu0 0
    %199 = vmatprep.subr.bf16.mxu0 0
    %200 = vmatpush2.bf16.msra.mxu0 0
    %201 = vmatprep.subr.bf16.mxu0 0
    %202 = vmatpush2.bf16.msra.mxu0 0
    %203 = vmatprep.subr.bf16.mxu0 0
    %204 = vmatpush2.bf16.msra.mxu0 0
    %205 = vmatprep.subr.bf16.mxu0 0
    %206 = vmatpush2.bf16.msra.mxu0 0
    %207 = vmatprep.subr.bf16.mxu0 0
    %208 = vmatpush2.bf16.msra.mxu0 0
    %209 = vmatprep.mubr.bf16.mxu0 0
    %210 = vmatmul.mubr.bf16.gmra.mxu0 %v166
    %v211 = vpop.f32.mrf.mxu0
    %v212 = vadd.f32 0.0, %v211
    %v213 = vpop.f32.mrf.mxu0
    %v214 = vadd.f32 0.0, %v213
    %v215 = vpop.f32.mrf.mxu0
    %v216 = vadd.f32 0.0, %v215
    %v217 = vpop.f32.mrf.mxu0
    %v218 = vadd.f32 0.0, %v217
    %219 = vmatprep.mubr.bf16.mxu0 0
    %220 = vmatmul.mubr.bf16.gmra.mxu0 %v169
    %v221 = vpop.f32.mrf.mxu0
    %v222 = vadd.f32 0.0, %v221
    %v223 = vpop.f32.mrf.mxu0
    %v224 = vadd.f32 0.0, %v223
    %v225 = vpop.f32.mrf.mxu0
    %v226 = vadd.f32 0.0, %v225
    %v227 = vpop.f32.mrf.mxu0
    %v228 = vadd.f32 0.0, %v227
    %229 = vmatprep.mubr.bf16.mxu0 0
    %230 = vmatmul.mubr.bf16.gmra.mxu0 %v172
    %v231 = vpop.f32.mrf.mxu0
    %v232 = vadd.f32 0.0, %v231
    %v233 = vpop.f32.mrf.mxu0
    %v234 = vadd.f32 0.0, %v233
    %v235 = vpop.f32.mrf.mxu0
    %v236 = vadd.f32 0.0, %v235
    %v237 = vpop.f32.mrf.mxu0
    %v238 = vadd.f32 0.0, %v237
    %239 = vmatprep.mubr.bf16.mxu0 0
    %240 = vmatmul.mubr.bf16.gmra.mxu0 %v175
    %v241 = vpop.f32.mrf.mxu0
    %v242 = vadd.f32 0.0, %v241
    %v243 = vpop.f32.mrf.mxu0
    %v244 = vadd.f32 0.0, %v243
    %v245 = vpop.f32.mrf.mxu0
    %v246 = vadd.f32 0.0, %v245
    %v247 = vpop.f32.mrf.mxu0
    %v248 = vadd.f32 0.0, %v247
    %249 = vdwg.mxu0
    %250 = vmatprep.subr.bf16.mxu0 0
    %251 = vmatpush1.bf16.msra.mxu0 0
    %252 = vmatprep.subr.bf16.mxu0 0
    %253 = vmatpush1.bf16.msra.mxu0 0
    %254 = vmatprep.subr.bf16.mxu0 0
    %255 = vmatpush1.bf16.msra.mxu0 0
    %256 = vmatprep.subr.bf16.mxu0 0
    %257 = vmatpush1.bf16.msra.mxu0 0
    %258 = vmatprep.subr.bf16.mxu0 0
    %259 = vmatpush1.bf16.msra.mxu0 0
    %260 = vmatprep.subr.bf16.mxu0 0
    %261 = vmatpush1.bf16.msra.mxu0 0
    %262 = vmatprep.subr.bf16.mxu0 0
    %263 = vmatpush1.bf16.msra.mxu0 0
    %264 = vmatprep.subr.bf16.mxu0 %v155
    %265 = vmatpush1.bf16.msra.mxu0 %v154
    %266 = vmatprep.subr.bf16.mxu0 0
    %267 = vmatpush2.bf16.msra.mxu0 0
    %268 = vmatprep.subr.bf16.mxu0 0
    %269 = vmatpush2.bf16.msra.mxu0 0
    %270 = vmatprep.subr.bf16.mxu0 0
    %271 = vmatpush2.bf16.msra.mxu0 0
    %272 = vmatprep.subr.bf16.mxu0 0
    %273 = vmatpush2.bf16.msra.mxu0 0
    %274 = vmatprep.subr.bf16.mxu0 0
    %275 = vmatpush2.bf16.msra.mxu0 0
    %276 = vmatprep.subr.bf16.mxu0 0
    %277 = vmatpush2.bf16.msra.mxu0 0
    %278 = vmatprep.subr.bf16.mxu0 0
    %279 = vmatpush2.bf16.msra.mxu0 0
    %280 = vmatprep.subr.bf16.mxu0 0
    %281 = vmatpush2.bf16.msra.mxu0 0
    %282 = vmatprep.mubr.bf16.mxu0 0
    %283 = vmatmul.mubr.bf16.gmra.mxu0 %v166
    %v284 = vpop.f32.mrf.mxu0
    %v285 = vadd.f32 0.0, %v284
    %v286 = vpop.f32.mrf.mxu0
    %v287 = vadd.f32 0.0, %v286
    %v288 = vpop.f32.mrf.mxu0
    %v289 = vadd.f32 0.0, %v288
    %v290 = vpop.f32.mrf.mxu0
    %v291 = vadd.f32 0.0, %v290
    %292 = vmatprep.mubr.bf16.mxu0 0
    %293 = vmatmul.mubr.bf16.gmra.mxu0 %v169
    %v294 = vpop.f32.mrf.mxu0
    %v295 = vadd.f32 0.0, %v294
    %v296 = vpop.f32.mrf.mxu0
    %v297 = vadd.f32 0.0, %v296
    %v298 = vpop.f32.mrf.mxu0
    %v299 = vadd.f32 0.0, %v298
    %v300 = vpop.f32.mrf.mxu0
    %v301 = vadd.f32 0.0, %v300
    %302 = vmatprep.mubr.bf16.mxu0 0
    %303 = vmatmul.mubr.bf16.gmra.mxu0 %v172
    %v304 = vpop.f32.mrf.mxu0
    %v305 = vadd.f32 0.0, %v304
    %v306 = vpop.f32.mrf.mxu0
    %v307 = vadd.f32 0.0, %v306
    %v308 = vpop.f32.mrf.mxu0
    %v309 = vadd.f32 0.0, %v308
    %v310 = vpop.f32.mrf.mxu0
    %v311 = vadd.f32 0.0, %v310
    %312 = vmatprep.mubr.bf16.mxu0 0
    %313 = vmatmul.mubr.bf16.gmra.mxu0 %v175
    %v314 = vpop.f32.mrf.mxu0
    %v315 = vadd.f32 0.0, %v314
    %v316 = vpop.f32.mrf.mxu0
    %v317 = vadd.f32 0.0, %v316
    %v318 = vpop.f32.mrf.mxu0
    %v319 = vadd.f32 0.0, %v318
    %v320 = vpop.f32.mrf.mxu0
    %v321 = vadd.f32 0.0, %v320
    %322 = vdwg.mxu0
    %323 = vmatprep.subr.bf16.mxu0 0
    %324 = vmatpush1.bf16.msra.mxu0 0
    %325 = vmatprep.subr.bf16.mxu0 0
    %326 = vmatpush1.bf16.msra.mxu0 0
    %327 = vmatprep.subr.bf16.mxu0 0
    %328 = vmatpush1.bf16.msra.mxu0 0
    %329 = vmatprep.subr.bf16.mxu0 0
    %330 = vmatpush1.bf16.msra.mxu0 0
    %331 = vmatprep.subr.bf16.mxu0 0
    %332 = vmatpush1.bf16.msra.mxu0 0
    %333 = vmatprep.subr.bf16.mxu0 0
    %334 = vmatpush1.bf16.msra.mxu0 0
    %335 = vmatprep.subr.bf16.mxu0 0
    %336 = vmatpush1.bf16.msra.mxu0 0
    %337 = vmatprep.subr.bf16.mxu0 %v157
    %338 = vmatpush1.bf16.msra.mxu0 %v156
    %339 = vmatprep.subr.bf16.mxu0 0
    %340 = vmatpush2.bf16.msra.mxu0 0
    %341 = vmatprep.subr.bf16.mxu0 0
    %342 = vmatpush2.bf16.msra.mxu0 0
    %343 = vmatprep.subr.bf16.mxu0 0
    %344 = vmatpush2.bf16.msra.mxu0 0
    %345 = vmatprep.subr.bf16.mxu0 0
    %346 = vmatpush2.bf16.msra.mxu0 0
    %347 = vmatprep.subr.bf16.mxu0 0
    %348 = vmatpush2.bf16.msra.mxu0 0
    %349 = vmatprep.subr.bf16.mxu0 0
    %350 = vmatpush2.bf16.msra.mxu0 0
    %351 = vmatprep.subr.bf16.mxu0 0
    %352 = vmatpush2.bf16.msra.mxu0 0
    %353 = vmatprep.subr.bf16.mxu0 0
    %354 = vmatpush2.bf16.msra.mxu0 0
    %355 = vmatprep.mubr.bf16.mxu0 0
    %356 = vmatmul.mubr.bf16.gmra.mxu0 %v166
    %v357 = vpop.f32.mrf.mxu0
    %v358 = vadd.f32 0.0, %v357
    %v359 = vpop.f32.mrf.mxu0
    %v360 = vadd.f32 0.0, %v359
    %v361 = vpop.f32.mrf.mxu0
    %v362 = vadd.f32 0.0, %v361
    %v363 = vpop.f32.mrf.mxu0
    %v364 = vadd.f32 0.0, %v363
    %365 = vmatprep.mubr.bf16.mxu0 0
    %366 = vmatmul.mubr.bf16.gmra.mxu0 %v169
    %v367 = vpop.f32.mrf.mxu0
    %v368 = vadd.f32 0.0, %v367
    %v369 = vpop.f32.mrf.mxu0
    %v370 = vadd.f32 0.0, %v369
    %v371 = vpop.f32.mrf.mxu0
    %v372 = vadd.f32 0.0, %v371
    %v373 = vpop.f32.mrf.mxu0
    %v374 = vadd.f32 0.0, %v373
    %375 = vmatprep.mubr.bf16.mxu0 0
    %376 = vmatmul.mubr.bf16.gmra.mxu0 %v172
    %v377 = vpop.f32.mrf.mxu0
    %v378 = vadd.f32 0.0, %v377
    %v379 = vpop.f32.mrf.mxu0
    %v380 = vadd.f32 0.0, %v379
    %v381 = vpop.f32.mrf.mxu0
    %v382 = vadd.f32 0.0, %v381
    %v383 = vpop.f32.mrf.mxu0
    %v384 = vadd.f32 0.0, %v383
    %385 = vmatprep.mubr.bf16.mxu0 0
    %386 = vmatmul.mubr.bf16.gmra.mxu0 %v175
    %v387 = vpop.f32.mrf.mxu0
    %v388 = vadd.f32 0.0, %v387
    %v389 = vpop.f32.mrf.mxu0
    %v390 = vadd.f32 0.0, %v389
    %v391 = vpop.f32.mrf.mxu0
    %v392 = vadd.f32 0.0, %v391
    %v393 = vpop.f32.mrf.mxu0
    %v394 = vadd.f32 0.0, %v393
    %395 = vdwg.mxu0
    %v396 = vadd.f32 %v68, %v212
    %v397 = vadd.f32 %v69, %v214
    %v398 = vadd.f32 %v70, %v285
    %v399 = vadd.f32 %v71, %v287
    %v400 = vadd.f32 %v72, %v358
    %v401 = vadd.f32 %v73, %v360
    %v402 = vadd.f32 %v74, %v216
    %v403 = vadd.f32 %v75, %v218
    %v404 = vadd.f32 %v76, %v289
    %v405 = vadd.f32 %v77, %v291
    %v406 = vadd.f32 %v78, %v362
    %v407 = vadd.f32 %v79, %v364
    %v408 = vadd.f32 %v80, %v222
    %v409 = vadd.f32 %v81, %v224
    %v410 = vadd.f32 %v82, %v295
    %v411 = vadd.f32 %v83, %v297
    %v412 = vadd.f32 %v84, %v368
    %v413 = vadd.f32 %v85, %v370
    %v414 = vadd.f32 %v86, %v226
    %v415 = vadd.f32 %v87, %v228
    %v416 = vadd.f32 %v88, %v299
    %v417 = vadd.f32 %v89, %v301
    %v418 = vadd.f32 %v90, %v372
    %v419 = vadd.f32 %v91, %v374
    %v420 = vadd.f32 %v92, %v232
    %v421 = vadd.f32 %v93, %v234
    %v422 = vadd.f32 %v94, %v305
    %v423 = vadd.f32 %v95, %v307
    %v424 = vadd.f32 %v96, %v378
    %v425 = vadd.f32 %v97, %v380
    %v426 = vadd.f32 %v98, %v236
    %v427 = vadd.f32 %v99, %v238
    %v428 = vadd.f32 %v100, %v309
    %v429 = vadd.f32 %v101, %v311
    %v430 = vadd.f32 %v102, %v382
    %v431 = vadd.f32 %v103, %v384
    %v432 = vadd.f32 %v104, %v242
    %v433 = vadd.f32 %v105, %v244
    %v434 = vadd.f32 %v106, %v315
    %v435 = vadd.f32 %v107, %v317
    %v436 = vadd.f32 %v108, %v388
    %v437 = vadd.f32 %v109, %v390
    %v438 = vadd.f32 %v110, %v246
    %v439 = vadd.f32 %v111, %v248
    %v440 = vadd.f32 %v112, %v319
    %v441 = vadd.f32 %v113, %v321
    %v442 = vadd.f32 %v114, %v392
    %v443 = vadd.f32 %v115, %v394
    %444 = vst [vmem:[#allocation2] sm:$0xff] %v396
    %445 = vst [vmem:[#allocation2 + $0x8] sm:$0xff] %v397
    %446 = vst [vmem:[#allocation2 + $0x10] sm:$0xff] %v398
    %447 = vst [vmem:[#allocation2 + $0x18] sm:$0xff] %v399
    %448 = vst [vmem:[#allocation2 + $0x20] sm:$0xff] %v400
    %449 = vst [vmem:[#allocation2 + $0x28] sm:$0xff] %v401
    %450 = vst [vmem:[#allocation2 + $0x30] sm:$0xff] %v402
    %451 = vst [vmem:[#allocation2 + $0x38] sm:$0xff] %v403
    %452 = vst [vmem:[#allocation2 + $0x40] sm:$0xff] %v404
    %453 = vst [vmem:[#allocation2 + $0x48] sm:$0xff] %v405
    %454 = vst [vmem:[#allocation2 + $0x50] sm:$0xff] %v406
    %455 = vst [vmem:[#allocation2 + $0x58] sm:$0xff] %v407
    %456 = vst [vmem:[#allocation2 + $0x60] sm:$0xff] %v408
    %457 = vst [vmem:[#allocation2 + $0x68] sm:$0xff] %v409
    %458 = vst [vmem:[#allocation2 + $0x70] sm:$0xff] %v410
    %459 = vst [vmem:[#allocation2 + $0x78] sm:$0xff] %v411
    %460 = vst [vmem:[#allocation2 + $0x80] sm:$0xff] %v412
    %461 = vst [vmem:[#allocation2 + $0x88] sm:$0xff] %v413
    %462 = vst [vmem:[#allocation2 + $0x90] sm:$0xff] %v414
    %463 = vst [vmem:[#allocation2 + $0x98] sm:$0xff] %v415
    %464 = vst [vmem:[#allocation2 + $0xa0] sm:$0xff] %v416
    %465 = vst [vmem:[#allocation2 + $0xa8] sm:$0xff] %v417
    %466 = vst [vmem:[#allocation2 + $0xb0] sm:$0xff] %v418
    %467 = vst [vmem:[#allocation2 + $0xb8] sm:$0xff] %v419
    %468 = vst [vmem:[#allocation2 + $0xc0] sm:$0xff] %v420
    %469 = vst [vmem:[#allocation2 + $0xc8] sm:$0xff] %v421
    %470 = vst [vmem:[#allocation2 + $0xd0] sm:$0xff] %v422
    %471 = vst [vmem:[#allocation2 + $0xd8] sm:$0xff] %v423
    %472 = vst [vmem:[#allocation2 + $0xe0] sm:$0xff] %v424
    %473 = vst [vmem:[#allocation2 + $0xe8] sm:$0xff] %v425
    %474 = vst [vmem:[#allocation2 + $0xf0] sm:$0xff] %v426
    %475 = vst [vmem:[#allocation2 + $0xf8] sm:$0xff] %v427
    %476 = vst [vmem:[#allocation2 + $0x100] sm:$0xff] %v428
    %477 = vst [vmem:[#allocation2 + $0x108] sm:$0xff] %v429
    %478 = vst [vmem:[#allocation2 + $0x110] sm:$0xff] %v430
    %479 = vst [vmem:[#allocation2 + $0x118] sm:$0xff] %v431
    %480 = vst [vmem:[#allocation2 + $0x120] sm:$0xff] %v432
    %481 = vst [vmem:[#allocation2 + $0x128] sm:$0xff] %v433
    %482 = vst [vmem:[#allocation2 + $0x130] sm:$0xff] %v434
    %483 = vst [vmem:[#allocation2 + $0x138] sm:$0xff] %v435
    %484 = vst [vmem:[#allocation2 + $0x140] sm:$0xff] %v436
    %485 = vst [vmem:[#allocation2 + $0x148] sm:$0xff] %v437
    %486 = vst [vmem:[#allocation2 + $0x150] sm:$0xff] %v438
    %487 = vst [vmem:[#allocation2 + $0x158] sm:$0xff] %v439
    %488 = vst [vmem:[#allocation2 + $0x160] sm:$0xff] %v440
    %489 = vst [vmem:[#allocation2 + $0x168] sm:$0xff] %v441
    %490 = vst [vmem:[#allocation2 + $0x170] sm:$0xff] %v442
    %491 = vst [vmem:[#allocation2 + $0x178] sm:$0xff] %v443
    // Predicated region
    $region18: #{tpu_custom_call.1} parent=1 // pred_check
      %p492 = pneg %p16
    $region19: #{tpu_custom_call.1} parent=1 // pred_check_branch
      %494 = sbr.rel (%p492) target = $region21
    $region20: #{tpu_custom_call.1} parent=1 // pred_region
      %v495 = vld [vmem:[#allocation2] sm:$0xff]
      %v496 = vld [vmem:[#allocation2 + $0x8] sm:$0xff]
      %v497 = vld [vmem:[#allocation2 + $0x10] sm:$0xff]
      %v498 = vld [vmem:[#allocation2 + $0x18] sm:$0xff]
      %v499 = vld [vmem:[#allocation2 + $0x20] sm:$0xff]
      %v500 = vld [vmem:[#allocation2 + $0x28] sm:$0xff]
      %v501 = vld [vmem:[#allocation2 + $0x30] sm:$0xff]
      %v502 = vld [vmem:[#allocation2 + $0x38] sm:$0xff]
      %v503 = vld [vmem:[#allocation2 + $0x40] sm:$0xff]
      %v504 = vld [vmem:[#allocation2 + $0x48] sm:$0xff]
      %v505 = vld [vmem:[#allocation2 + $0x50] sm:$0xff]
      %v506 = vld [vmem:[#allocation2 + $0x58] sm:$0xff]
      %v507 = vld [vmem:[#allocation2 + $0x60] sm:$0xff]
      %v508 = vld [vmem:[#allocation2 + $0x68] sm:$0xff]
      %v509 = vld [vmem:[#allocation2 + $0x70] sm:$0xff]
      %v510 = vld [vmem:[#allocation2 + $0x78] sm:$0xff]
      %v511 = vld [vmem:[#allocation2 + $0x80] sm:$0xff]
      %v512 = vld [vmem:[#allocation2 + $0x88] sm:$0xff]
      %v513 = vld [vmem:[#allocation2 + $0x90] sm:$0xff]
      %v514 = vld [vmem:[#allocation2 + $0x98] sm:$0xff]
      %v515 = vld [vmem:[#allocation2 + $0xa0] sm:$0xff]
      %v516 = vld [vmem:[#allocation2 + $0xa8] sm:$0xff]
      %v517 = vld [vmem:[#allocation2 + $0xb0] sm:$0xff]
      %v518 = vld [vmem:[#allocation2 + $0xb8] sm:$0xff]
      %v519 = vld [vmem:[#allocation2 + $0xc0] sm:$0xff]
      %v520 = vld [vmem:[#allocation2 + $0xc8] sm:$0xff]
      %v521 = vld [vmem:[#allocation2 + $0xd0] sm:$0xff]
      %v522 = vld [vmem:[#allocation2 + $0xd8] sm:$0xff]
      %v523 = vld [vmem:[#allocation2 + $0xe0] sm:$0xff]
      %v524 = vld [vmem:[#allocation2 + $0xe8] sm:$0xff]
      %v525 = vld [vmem:[#allocation2 + $0xf0] sm:$0xff]
      %v526 = vld [vmem:[#allocation2 + $0xf8] sm:$0xff]
      %v527 = vld [vmem:[#allocation2 + $0x100] sm:$0xff]
      %v528 = vld [vmem:[#allocation2 + $0x108] sm:$0xff]
      %v529 = vld [vmem:[#allocation2 + $0x110] sm:$0xff]
      %v530 = vld [vmem:[#allocation2 + $0x118] sm:$0xff]
      %v531 = vld [vmem:[#allocation2 + $0x120] sm:$0xff]
      %v532 = vld [vmem:[#allocation2 + $0x128] sm:$0xff]
      %v533 = vld [vmem:[#allocation2 + $0x130] sm:$0xff]
      %v534 = vld [vmem:[#allocation2 + $0x138] sm:$0xff]
      %v535 = vld [vmem:[#allocation2 + $0x140] sm:$0xff]
      %v536 = vld [vmem:[#allocation2 + $0x148] sm:$0xff]
      %v537 = vld [vmem:[#allocation2 + $0x150] sm:$0xff]
      %v538 = vld [vmem:[#allocation2 + $0x158] sm:$0xff]
      %v539 = vld [vmem:[#allocation2 + $0x160] sm:$0xff]
      %v540 = vld [vmem:[#allocation2 + $0x168] sm:$0xff]
      %v541 = vld [vmem:[#allocation2 + $0x170] sm:$0xff]
      %v542 = vld [vmem:[#allocation2 + $0x178] sm:$0xff]
      %v543 = vld [vmem:[%s2] sm:$0x3f]
      %v545 = vlaneseq
      %v546 = vshrl.u32 %v545, 7
      %v547 = vsub.s32 0, %v546
      %v548 = vrot.slane %v543, %v547
      %v549 = vlaneseq
      %v550 = vshrl.u32 %v549, 7
      %v551 = vsub.s32 1, %v550
      %v552 = vrot.slane %v543, %v551
      %v553 = vlaneseq
      %v554 = vshrl.u32 %v553, 7
      %v555 = vsub.s32 2, %v554
      %v556 = vrot.slane %v543, %v555
      %v557 = vlaneseq
      %v558 = vshrl.u32 %v557, 7
      %v559 = vsub.s32 3, %v558
      %v560 = vrot.slane %v543, %v559
      %v561 = vlaneseq
      %v562 = vshrl.u32 %v561, 7
      %v563 = vsub.s32 4, %v562
      %v564 = vrot.slane %v543, %v563
      %v565 = vlaneseq
      %v566 = vshrl.u32 %v565, 7
      %v567 = vsub.s32 5, %v566
      %v568 = vrot.slane %v543, %v567
      %v575 = vadd.f32 %v495, %v548
      %v576 = vadd.f32 %v496, %v552
      %v577 = vadd.f32 %v497, %v556
      %v578 = vadd.f32 %v498, %v560
      %v579 = vadd.f32 %v499, %v564
      %v580 = vadd.f32 %v500, %v568
      %v581 = vadd.f32 %v501, %v548
      %v582 = vadd.f32 %v502, %v552
      %v583 = vadd.f32 %v503, %v556
      %v584 = vadd.f32 %v504, %v560
      %v585 = vadd.f32 %v505, %v564
      %v586 = vadd.f32 %v506, %v568
      %v587 = vadd.f32 %v507, %v548
      %v588 = vadd.f32 %v508, %v552
      %v589 = vadd.f32 %v509, %v556
      %v590 = vadd.f32 %v510, %v560
      %v591 = vadd.f32 %v511, %v564
      %v592 = vadd.f32 %v512, %v568
      %v593 = vadd.f32 %v513, %v548
      %v594 = vadd.f32 %v514, %v552
      %v595 = vadd.f32 %v515, %v556
      %v596 = vadd.f32 %v516, %v560
      %v597 = vadd.f32 %v517, %v564
      %v598 = vadd.f32 %v518, %v568
      %v599 = vadd.f32 %v519, %v548
      %v600 = vadd.f32 %v520, %v552
      %v601 = vadd.f32 %v521, %v556
      %v602 = vadd.f32 %v522, %v560
      %v603 = vadd.f32 %v523, %v564
      %v604 = vadd.f32 %v524, %v568
      %v605 = vadd.f32 %v525, %v548
      %v606 = vadd.f32 %v526, %v552
      %v607 = vadd.f32 %v527, %v556
      %v608 = vadd.f32 %v528, %v560
      %v609 = vadd.f32 %v529, %v564
      %v610 = vadd.f32 %v530, %v568
      %v611 = vadd.f32 %v531, %v548
      %v612 = vadd.f32 %v532, %v552
      %v613 = vadd.f32 %v533, %v556
      %v614 = vadd.f32 %v534, %v560
      %v615 = vadd.f32 %v535, %v564
      %v616 = vadd.f32 %v536, %v568
      %v617 = vadd.f32 %v537, %v548
      %v618 = vadd.f32 %v538, %v552
      %v619 = vadd.f32 %v539, %v556
      %v620 = vadd.f32 %v540, %v560
      %v621 = vadd.f32 %v541, %v564
      %v622 = vadd.f32 %v542, %v568
      %v623 = vpack.c.bf16 %v581, %v575
      %v624 = vpack.c.bf16 %v582, %v576
      %v625 = vpack.c.bf16 %v583, %v577
      %v626 = vpack.c.bf16 %v584, %v578
      %v627 = vpack.c.bf16 %v585, %v579
      %v628 = vpack.c.bf16 %v586, %v580
      %v629 = vpack.c.bf16 %v593, %v587
      %v630 = vpack.c.bf16 %v594, %v588
      %v631 = vpack.c.bf16 %v595, %v589
      %v632 = vpack.c.bf16 %v596, %v590
      %v633 = vpack.c.bf16 %v597, %v591
      %v634 = vpack.c.bf16 %v598, %v592
      %v635 = vpack.c.bf16 %v605, %v599
      %v636 = vpack.c.bf16 %v606, %v600
      %v637 = vpack.c.bf16 %v607, %v601
      %v638 = vpack.c.bf16 %v608, %v602
      %v639 = vpack.c.bf16 %v609, %v603
      %v640 = vpack.c.bf16 %v610, %v604
      %v641 = vpack.c.bf16 %v617, %v611
      %v642 = vpack.c.bf16 %v618, %v612
      %v643 = vpack.c.bf16 %v619, %v613
      %v644 = vpack.c.bf16 %v620, %v614
      %v645 = vpack.c.bf16 %v621, %v615
      %v646 = vpack.c.bf16 %v622, %v616
      %v671 = vunpack.c.l.b16 %v623
      %v672 = vunpack.c.l.b16 %v624
      %v673 = vunpack.c.l.b16 %v625
      %v674 = vunpack.c.l.b16 %v626
      %v675 = vunpack.c.l.b16 %v627
      %v676 = vunpack.c.l.b16 %v628
      %v677 = vunpack.c.h.b16 %v623
      %v678 = vunpack.c.h.b16 %v624
      %v679 = vunpack.c.h.b16 %v625
      %v680 = vunpack.c.h.b16 %v626
      %v681 = vunpack.c.h.b16 %v627
      %v682 = vunpack.c.h.b16 %v628
      %v683 = vunpack.c.l.b16 %v629
      %v684 = vunpack.c.l.b16 %v630
      %v685 = vunpack.c.l.b16 %v631
      %v686 = vunpack.c.l.b16 %v632
      %v687 = vunpack.c.l.b16 %v633
      %v688 = vunpack.c.l.b16 %v634
      %v689 = vunpack.c.h.b16 %v629
      %v690 = vunpack.c.h.b16 %v630
      %v691 = vunpack.c.h.b16 %v631
      %v692 = vunpack.c.h.b16 %v632
      %v693 = vunpack.c.h.b16 %v633
      %v694 = vunpack.c.h.b16 %v634
      %v695 = vunpack.c.l.b16 %v635
      %v696 = vunpack.c.l.b16 %v636
      %v697 = vunpack.c.l.b16 %v637
      %v698 = vunpack.c.l.b16 %v638
      %v699 = vunpack.c.l.b16 %v639
      %v700 = vunpack.c.l.b16 %v640
      %v701 = vunpack.c.h.b16 %v635
      %v702 = vunpack.c.h.b16 %v636
      %v703 = vunpack.c.h.b16 %v637
      %v704 = vunpack.c.h.b16 %v638
      %v705 = vunpack.c.h.b16 %v639
      %v706 = vunpack.c.h.b16 %v640
      %v707 = vunpack.c.l.b16 %v641
      %v708 = vunpack.c.l.b16 %v642
      %v709 = vunpack.c.l.b16 %v643
      %v710 = vunpack.c.l.b16 %v644
      %v711 = vunpack.c.l.b16 %v645
      %v712 = vunpack.c.l.b16 %v646
      %v713 = vunpack.c.h.b16 %v641
      %v714 = vunpack.c.h.b16 %v642
      %v715 = vunpack.c.h.b16 %v643
      %v716 = vunpack.c.h.b16 %v644
      %v717 = vunpack.c.h.b16 %v645
      %v718 = vunpack.c.h.b16 %v646
      %v719 = vpack.c.b16 %v672, %v671
      %v720 = vpack.c.b16 %v674, %v673
      %v721 = vpack.c.b16 %v676, %v675
      %v722 = vpack.c.b16 %v678, %v677
      %v723 = vpack.c.b16 %v680, %v679
      %v724 = vpack.c.b16 %v682, %v681
      %v725 = vpack.c.b16 %v684, %v683
      %v726 = vpack.c.b16 %v686, %v685
      %v727 = vpack.c.b16 %v688, %v687
      %v728 = vpack.c.b16 %v690, %v689
      %v729 = vpack.c.b16 %v692, %v691
      %v730 = vpack.c.b16 %v694, %v693
      %v731 = vpack.c.b16 %v696, %v695
      %v732 = vpack.c.b16 %v698, %v697
      %v733 = vpack.c.b16 %v700, %v699
      %v734 = vpack.c.b16 %v702, %v701
      %v735 = vpack.c.b16 %v704, %v703
      %v736 = vpack.c.b16 %v706, %v705
      %v737 = vpack.c.b16 %v708, %v707
      %v738 = vpack.c.b16 %v710, %v709
      %v739 = vpack.c.b16 %v712, %v711
      %v740 = vpack.c.b16 %v714, %v713
      %v741 = vpack.c.b16 %v716, %v715
      %v742 = vpack.c.b16 %v718, %v717
      %767 = vst [vmem:[#allocation3] sm:$0xff] %v719
      %768 = vst [vmem:[#allocation3 + $0x8] sm:$0xff] %v720
      %769 = vst [vmem:[#allocation3 + $0x10] sm:$0xff] %v721
      %770 = vst [vmem:[#allocation3 + $0x18] sm:$0xff] %v722
      %771 = vst [vmem:[#allocation3 + $0x20] sm:$0xff] %v723
      %772 = vst [vmem:[#allocation3 + $0x28] sm:$0xff] %v724
      %773 = vst [vmem:[#allocation3 + $0x30] sm:$0xff] %v725
      %774 = vst [vmem:[#allocation3 + $0x38] sm:$0xff] %v726
      %775 = vst [vmem:[#allocation3 + $0x40] sm:$0xff] %v727
      %776 = vst [vmem:[#allocation3 + $0x48] sm:$0xff] %v728
      %777 = vst [vmem:[#allocation3 + $0x50] sm:$0xff] %v729
      %778 = vst [vmem:[#allocation3 + $0x58] sm:$0xff] %v730
      %779 = vst [vmem:[#allocation3 + $0x60] sm:$0xff] %v731
      %780 = vst [vmem:[#allocation3 + $0x68] sm:$0xff] %v732
      %781 = vst [vmem:[#allocation3 + $0x70] sm:$0xff] %v733
      %782 = vst [vmem:[#allocation3 + $0x78] sm:$0xff] %v734
      %783 = vst [vmem:[#allocation3 + $0x80] sm:$0xff] %v735
      %784 = vst [vmem:[#allocation3 + $0x88] sm:$0xff] %v736
      %785 = vst [vmem:[#allocation3 + $0x90] sm:$0xff] %v737
      %786 = vst [vmem:[#allocation3 + $0x98] sm:$0xff] %v738
      %787 = vst [vmem:[#allocation3 + $0xa0] sm:$0xff] %v739
      %788 = vst [vmem:[#allocation3 + $0xa8] sm:$0xff] %v740
      %789 = vst [vmem:[#allocation3 + $0xb0] sm:$0xff] %v741
      %790 = vst [vmem:[#allocation3 + $0xb8] sm:$0xff] %v742
    $region21: #{tpu_custom_call.1} parent=1 // pred_fallthru
      _
    // Predicated region
    $region22: #{tpu_custom_call.1} parent=1 // pred_check
      _
    $region23: #{tpu_custom_call.1} parent=1 // pred_check_branch
      %792 = sbr.rel (0) target = $region25
    $region24: #{tpu_custom_call.1} parent=1 // pred_region
      %s794 = ssub.s32 3072, 3072
      %795 = vsyncadd [#allocation4], %s794
      %s796 = sshll.u32 [#allocation3], 4
      %s797 = int_to_ptr.vmem [resolvable:$true] %s796
      %802 = dma.vmem_to_hbm [thread:$0]  %s797, 3072, %s3, [#allocation4], 384, 384, 24
    $region25: #{tpu_custom_call.1} parent=1 // pred_fallthru
      _
    // Predicated region
    $region26: #{tpu_custom_call.1} parent=1 // pred_check
      _
    $region27: #{tpu_custom_call.1} parent=1 // pred_check_branch
      %804 = sbr.rel (0) target = $region29
    $region28: #{tpu_custom_call.1} parent=1 // pred_region
      %805 = dma.done [#allocation4], 3072
    $region29: #{tpu_custom_call.1} parent=1 // pred_fallthru
      _
    %806 = vsyncpa [#allocation4], 1

</llo_original>
